<compile_context>
chip_gen: v7x
topology: tpu7x:2x2x1
jax: 0.10.0
libtpu: 0.0.40
codegen_flags: <defaults>
</compile_context>

<pallas_src>
import functools

import jax
import jax.numpy as jnp
from jax.experimental import pallas as pl
from jax.experimental.pallas import tpu as pltpu


def _conv1x1_elementwise_kernel(w_ref, b_ref, x_ref, o_ref, *, c_in, c_out):
    # w_ref: (C_out, C_in) f32 in SMEM, b_ref: (C_out,) f32 in SMEM
    # x_ref: (1, C_in,  TILE_R, 128) f32 in VMEM
    # o_ref: (1, C_out, TILE_R, 128) f32 in VMEM
    inv = 1.0 / 15.5
    xs = [x_ref[0, c] for c in range(c_in)]          # dense (TILE_R, 128) tiles
    for o in range(c_out):
        t1 = xs[0] * w_ref[o, 0]
        for c in range(1, c_in):
            t1 = t1 + xs[c] * w_ref[o, c]
        t1 = t1 + b_ref[o]
        t2 = t1 + 6.5
        t3 = jnp.clip(t2, 3.4, 11.9)
        o_ref[0, o] = (t1 * t3) * inv


def _pick_tile_r(num_rows):
    # Largest multiple-of-8 divisor from a small candidate set, else full extent.
    for cand in (128, 64, 32, 16, 8):
        if num_rows % cand == 0:
            return cand
    return num_rows


@jax.jit
def model_forward(x, weight, bias):
    """x: (N, C_in, H, W) f32; weight: (C_out, C_in, 1, 1) f32; bias: (C_out,) f32."""
    N, C_in, H, W = x.shape
    C_out = weight.shape[0]
    HW = H * W

    # Free flatten of contiguous NCHW; pad flat spatial to a multiple of 128
    # only if needed (no-op for the shapes of interest).
    xf = x.reshape(N, C_in, HW)
    HW_pad = ((HW + 127) // 128) * 128
    if HW_pad != HW:
        xf = jnp.pad(xf, ((0, 0), (0, 0), (0, HW_pad - HW)))
    R = HW_pad // 128
    x4 = xf.reshape(N, C_in, R, 128)                  # lane-dense layout

    TILE_R = _pick_tile_r(R)

    w2d = weight.reshape(C_out, C_in).astype(jnp.float32)
    b1d = bias.astype(jnp.float32)

    interior4 = pl.pallas_call(
        functools.partial(_conv1x1_elementwise_kernel, c_in=C_in, c_out=C_out),
        out_shape=jax.ShapeDtypeStruct((N, C_out, R, 128), jnp.float32),
        grid=(N, R // TILE_R),
        in_specs=[
            pl.BlockSpec(memory_space=pltpu.MemorySpace.SMEM),    # weights
            pl.BlockSpec(memory_space=pltpu.MemorySpace.SMEM),    # bias
            pl.BlockSpec((1, C_in, TILE_R, 128), lambda n, r: (n, 0, r, 0)),
        ],
        out_specs=pl.BlockSpec((1, C_out, TILE_R, 128), lambda n, r: (n, 0, r, 0)),
        compiler_params=pltpu.CompilerParams(
            dimension_semantics=("parallel", "parallel")),
    )(w2d, b1d, x4)

    interior = interior4.reshape(N, C_out, HW_pad)[:, :, :HW].reshape(N, C_out, H, W)

    # Border pixels see only zero-padded input, so t1 = bias there:
    # border_const[c] = clip(b[c] + 6.5, 3.4, 11.9) * b[c] / 15.5
    t1b = b1d
    t3b = jnp.clip(t1b + 6.5, 3.4, 11.9)
    border = (t1b * t3b) * (1.0 / 15.5)

    Hp, Wp = H + 2, W + 2
    out = jnp.broadcast_to(border.reshape(1, C_out, 1, 1), (N, C_out, Hp, Wp))
    out = out.at[:, :, 1:Hp - 1, 1:Wp - 1].set(interior)
    return out


def _reference(x, weight, bias):
    # Pure-JAX reference (same op order as the PyTorch module).
    xp = jnp.pad(x, ((0, 0), (0, 0), (1, 1), (1, 1)))
    t1 = jnp.einsum('oc,nchw->nohw', weight.reshape(weight.shape[0], -1), xp) \
         + bias.reshape(1, -1, 1, 1)
    t2 = t1 + 6.5
    t3 = jnp.clip(t2, 3.4, 11.9)
    t4 = t1 * t3
    return t4 / 15.5


if __name__ == "__main__":
    key = jax.random.PRNGKey(0)
    kx, kw, kb = jax.random.split(key, 3)

    # Small shapes consistent with the module: Conv2d(3, 3, 1, padding=1).
    N, C, H, W = 2, 3, 16, 16
    x = jax.random.normal(kx, (N, C, H, W), dtype=jnp.float32)

    # Deterministic parameter init (PyTorch default-like uniform range).
    fan_in = C * 1 * 1
    bound = 1.0 / (fan_in ** 0.5)
    weight = jax.random.uniform(kw, (3, C, 1, 1), jnp.float32, -bound, bound)
    bias = jax.random.uniform(kb, (3,), jnp.float32, -bound, bound)

    out = model_forward(x, weight, bias)
    out = jax.block_until_ready(out)

    ref = _reference(x, weight, bias)
    assert out.shape == (N, 3, H + 2, W + 2)
    assert jnp.allclose(out, ref, atol=1e-5, rtol=1e-5)

    print("KERNEL_OK")
</pallas_src>

<mosaic_0001>
module attributes {stable_mosaic.version = 11 : i64} {
  func.func @_conv1x1_elementwise_kernel(%arg0: i32, %arg1: i32, %arg2: memref<3x3xf32, #tpu.memory_space<smem>>, %arg3: memref<3xf32, #tpu.memory_space<smem>>, %arg4: memref<1x3x2x128xf32, #tpu.memory_space<vmem>>, %arg5: memref<1x3x2x128xf32, #tpu.memory_space<vmem>>) attributes {dimension_semantics = [#tpu.dimension_semantics<parallel>, #tpu.dimension_semantics<parallel>], iteration_bounds = array<i64: 2, 1>, scalar_prefetch = 0 : i64, scratch_operands = 0 : i64, tpu.core_type = #tpu.core_type<tc>, window_params = [{transform_indices = @transform_0, window_bounds = array<i64: 3, 3>}, {transform_indices = @transform_1, window_bounds = array<i64: 3>}, {transform_indices = @transform_2, window_bounds = array<i64: 1, 3, 2, 128>}, {transform_indices = @transform_3, window_bounds = array<i64: 1, 3, 2, 128>}]} {
    %c0 = arith.constant 0 : index
    %c0_0 = arith.constant 0 : index
    %c0_1 = arith.constant 0 : index
    %c0_2 = arith.constant 0 : index
    %0 = vector.load %arg4[%c0, %c0_0, %c0_1, %c0_2] : memref<1x3x2x128xf32, #tpu.memory_space<vmem>>, vector<1x1x2x128xf32>
    %1 = vector.shape_cast %0 : vector<1x1x2x128xf32> to vector<2x128xf32>
    %c0_3 = arith.constant 0 : index
    %c1 = arith.constant 1 : index
    %c0_4 = arith.constant 0 : index
    %c0_5 = arith.constant 0 : index
    %2 = vector.load %arg4[%c0_3, %c1, %c0_4, %c0_5] : memref<1x3x2x128xf32, #tpu.memory_space<vmem>>, vector<1x1x2x128xf32>
    %3 = vector.shape_cast %2 : vector<1x1x2x128xf32> to vector<2x128xf32>
    %c0_6 = arith.constant 0 : index
    %c2 = arith.constant 2 : index
    %c0_7 = arith.constant 0 : index
    %c0_8 = arith.constant 0 : index
    %4 = vector.load %arg4[%c0_6, %c2, %c0_7, %c0_8] : memref<1x3x2x128xf32, #tpu.memory_space<vmem>>, vector<1x1x2x128xf32>
    %5 = vector.shape_cast %4 : vector<1x1x2x128xf32> to vector<2x128xf32>
    %c0_9 = arith.constant 0 : index
    %c0_10 = arith.constant 0 : index
    %6 = memref.load %arg2[%c0_9, %c0_10] : memref<3x3xf32, #tpu.memory_space<smem>>
    %7 = vector.broadcast %6 : f32 to vector<2x128xf32>
    %8 = arith.mulf %1, %7 : vector<2x128xf32>
    %c0_11 = arith.constant 0 : index
    %c1_12 = arith.constant 1 : index
    %9 = memref.load %arg2[%c0_11, %c1_12] : memref<3x3xf32, #tpu.memory_space<smem>>
    %10 = vector.broadcast %9 : f32 to vector<2x128xf32>
    %11 = arith.mulf %3, %10 : vector<2x128xf32>
    %12 = arith.addf %8, %11 : vector<2x128xf32>
    %c0_13 = arith.constant 0 : index
    %c2_14 = arith.constant 2 : index
    %13 = memref.load %arg2[%c0_13, %c2_14] : memref<3x3xf32, #tpu.memory_space<smem>>
    %14 = vector.broadcast %13 : f32 to vector<2x128xf32>
    %15 = arith.mulf %5, %14 : vector<2x128xf32>
    %16 = arith.addf %12, %15 : vector<2x128xf32>
    %c0_15 = arith.constant 0 : index
    %17 = memref.load %arg3[%c0_15] : memref<3xf32, #tpu.memory_space<smem>>
    %18 = vector.broadcast %17 : f32 to vector<2x128xf32>
    %19 = arith.addf %16, %18 : vector<2x128xf32>
    %cst = arith.constant 6.500000e+00 : f32
    %20 = vector.broadcast %cst : f32 to vector<2x128xf32>
    %21 = arith.addf %19, %20 : vector<2x128xf32>
    %cst_16 = arith.constant 3.400000e+00 : f32
    %cst_17 = arith.constant 1.190000e+01 : f32
    %22 = vector.broadcast %cst_16 : f32 to vector<2x128xf32>
    %23 = arith.maximumf %22, %21 : vector<2x128xf32>
    %24 = vector.broadcast %cst_17 : f32 to vector<2x128xf32>
    %25 = arith.minimumf %24, %23 : vector<2x128xf32>
    %26 = arith.mulf %19, %25 : vector<2x128xf32>
    %cst_18 = arith.constant 0.0645161271 : f32
    %27 = vector.broadcast %cst_18 : f32 to vector<2x128xf32>
    %28 = arith.mulf %26, %27 : vector<2x128xf32>
    %c0_19 = arith.constant 0 : index
    %c0_20 = arith.constant 0 : index
    %c0_21 = arith.constant 0 : index
    %c0_22 = arith.constant 0 : index
    %29 = vector.load %arg5[%c0_19, %c0_20, %c0_21, %c0_22] : memref<1x3x2x128xf32, #tpu.memory_space<vmem>>, vector<1x1x2x128xf32>
    %30 = vector.shape_cast %29 : vector<1x1x2x128xf32> to vector<2x128xf32>
    %31 = vector.shape_cast %28 : vector<2x128xf32> to vector<1x1x2x128xf32>
    tpu.vector_store %arg5[%c0_19, %c0_20, %c0_21, %c0_22], %31 {strides = array<i32>} : memref<1x3x2x128xf32, #tpu.memory_space<vmem>>, vector<1x1x2x128xf32>,
    %c1_23 = arith.constant 1 : index
    %c0_24 = arith.constant 0 : index
    %32 = memref.load %arg2[%c1_23, %c0_24] : memref<3x3xf32, #tpu.memory_space<smem>>
    %33 = vector.broadcast %32 : f32 to vector<2x128xf32>
    %34 = arith.mulf %1, %33 : vector<2x128xf32>
    %c1_25 = arith.constant 1 : index
    %c1_26 = arith.constant 1 : index
    %35 = memref.load %arg2[%c1_25, %c1_26] : memref<3x3xf32, #tpu.memory_space<smem>>
    %36 = vector.broadcast %35 : f32 to vector<2x128xf32>
    %37 = arith.mulf %3, %36 : vector<2x128xf32>
    %38 = arith.addf %34, %37 : vector<2x128xf32>
    %c1_27 = arith.constant 1 : index
    %c2_28 = arith.constant 2 : index
    %39 = memref.load %arg2[%c1_27, %c2_28] : memref<3x3xf32, #tpu.memory_space<smem>>
    %40 = vector.broadcast %39 : f32 to vector<2x128xf32>
    %41 = arith.mulf %5, %40 : vector<2x128xf32>
    %42 = arith.addf %38, %41 : vector<2x128xf32>
    %c1_29 = arith.constant 1 : index
    %43 = memref.load %arg3[%c1_29] : memref<3xf32, #tpu.memory_space<smem>>
    %44 = vector.broadcast %43 : f32 to vector<2x128xf32>
    %45 = arith.addf %42, %44 : vector<2x128xf32>
    %cst_30 = arith.constant 6.500000e+00 : f32
    %46 = vector.broadcast %cst_30 : f32 to vector<2x128xf32>
    %47 = arith.addf %45, %46 : vector<2x128xf32>
    %cst_31 = arith.constant 3.400000e+00 : f32
    %cst_32 = arith.constant 1.190000e+01 : f32
    %48 = vector.broadcast %cst_31 : f32 to vector<2x128xf32>
    %49 = arith.maximumf %48, %47 : vector<2x128xf32>
    %50 = vector.broadcast %cst_32 : f32 to vector<2x128xf32>
    %51 = arith.minimumf %50, %49 : vector<2x128xf32>
    %52 = arith.mulf %45, %51 : vector<2x128xf32>
    %cst_33 = arith.constant 0.0645161271 : f32
    %53 = vector.broadcast %cst_33 : f32 to vector<2x128xf32>
    %54 = arith.mulf %52, %53 : vector<2x128xf32>
    %c0_34 = arith.constant 0 : index
    %c1_35 = arith.constant 1 : index
    %c0_36 = arith.constant 0 : index
    %c0_37 = arith.constant 0 : index
    %55 = vector.load %arg5[%c0_34, %c1_35, %c0_36, %c0_37] : memref<1x3x2x128xf32, #tpu.memory_space<vmem>>, vector<1x1x2x128xf32>
    %56 = vector.shape_cast %55 : vector<1x1x2x128xf32> to vector<2x128xf32>
    %57 = vector.shape_cast %54 : vector<2x128xf32> to vector<1x1x2x128xf32>
    tpu.vector_store %arg5[%c0_34, %c1_35, %c0_36, %c0_37], %57 {strides = array<i32>} : memref<1x3x2x128xf32, #tpu.memory_space<vmem>>, vector<1x1x2x128xf32>,
    %c2_38 = arith.constant 2 : index
    %c0_39 = arith.constant 0 : index
    %58 = memref.load %arg2[%c2_38, %c0_39] : memref<3x3xf32, #tpu.memory_space<smem>>
    %59 = vector.broadcast %58 : f32 to vector<2x128xf32>
    %60 = arith.mulf %1, %59 : vector<2x128xf32>
    %c2_40 = arith.constant 2 : index
    %c1_41 = arith.constant 1 : index
    %61 = memref.load %arg2[%c2_40, %c1_41] : memref<3x3xf32, #tpu.memory_space<smem>>
    %62 = vector.broadcast %61 : f32 to vector<2x128xf32>
    %63 = arith.mulf %3, %62 : vector<2x128xf32>
    %64 = arith.addf %60, %63 : vector<2x128xf32>
    %c2_42 = arith.constant 2 : index
    %c2_43 = arith.constant 2 : index
    %65 = memref.load %arg2[%c2_42, %c2_43] : memref<3x3xf32, #tpu.memory_space<smem>>
    %66 = vector.broadcast %65 : f32 to vector<2x128xf32>
    %67 = arith.mulf %5, %66 : vector<2x128xf32>
    %68 = arith.addf %64, %67 : vector<2x128xf32>
    %c2_44 = arith.constant 2 : index
    %69 = memref.load %arg3[%c2_44] : memref<3xf32, #tpu.memory_space<smem>>
    %70 = vector.broadcast %69 : f32 to vector<2x128xf32>
    %71 = arith.addf %68, %70 : vector<2x128xf32>
    %cst_45 = arith.constant 6.500000e+00 : f32
    %72 = vector.broadcast %cst_45 : f32 to vector<2x128xf32>
    %73 = arith.addf %71, %72 : vector<2x128xf32>
    %cst_46 = arith.constant 3.400000e+00 : f32
    %cst_47 = arith.constant 1.190000e+01 : f32
    %74 = vector.broadcast %cst_46 : f32 to vector<2x128xf32>
    %75 = arith.maximumf %74, %73 : vector<2x128xf32>
    %76 = vector.broadcast %cst_47 : f32 to vector<2x128xf32>
    %77 = arith.minimumf %76, %75 : vector<2x128xf32>
    %78 = arith.mulf %71, %77 : vector<2x128xf32>
    %cst_48 = arith.constant 0.0645161271 : f32
    %79 = vector.broadcast %cst_48 : f32 to vector<2x128xf32>
    %80 = arith.mulf %78, %79 : vector<2x128xf32>
    %c0_49 = arith.constant 0 : index
    %c2_50 = arith.constant 2 : index
    %c0_51 = arith.constant 0 : index
    %c0_52 = arith.constant 0 : index
    %81 = vector.load %arg5[%c0_49, %c2_50, %c0_51, %c0_52] : memref<1x3x2x128xf32, #tpu.memory_space<vmem>>, vector<1x1x2x128xf32>
    %82 = vector.shape_cast %81 : vector<1x1x2x128xf32> to vector<2x128xf32>
    %83 = vector.shape_cast %80 : vector<2x128xf32> to vector<1x1x2x128xf32>
    tpu.vector_store %arg5[%c0_49, %c2_50, %c0_51, %c0_52], %83 {strides = array<i32>} : memref<1x3x2x128xf32, #tpu.memory_space<vmem>>, vector<1x1x2x128xf32>,
    return
  }
  func.func @transform_0(%arg0: i32, %arg1: i32) -> (i32, i32) {
    %c0_i32 = arith.constant 0 : i32
    %c0_i32_0 = arith.constant 0 : i32
    %c0_i32_1 = arith.constant 0 : i32
    return %c0_i32, %c0_i32_0 : i32, i32
  }
  func.func @transform_1(%arg0: i32, %arg1: i32) -> i32 {
    %c0_i32 = arith.constant 0 : i32
    %c0_i32_0 = arith.constant 0 : i32
    return %c0_i32 : i32
  }
  func.func @transform_2(%arg0: i32, %arg1: i32) -> (i32, i32, i32, i32) {
    %c0_i32 = arith.constant 0 : i32
    %c0_i32_0 = arith.constant 0 : i32
    %c0_i32_1 = arith.constant 0 : i32
    return %arg0, %c0_i32, %arg1, %c0_i32_0 : i32, i32, i32, i32
  }
  func.func @transform_3(%arg0: i32, %arg1: i32) -> (i32, i32, i32, i32) {
    %c0_i32 = arith.constant 0 : i32
    %c0_i32_0 = arith.constant 0 : i32
    %c0_i32_1 = arith.constant 0 : i32
    return %arg0, %c0_i32, %arg1, %c0_i32_0 : i32, i32, i32, i32
  }
}

</mosaic_0001>

<llo_original>
// kernel: model_forward.1
$region0: #{model_forward.1}
  #allocation0 [shape = 'u32[]', space=smem, size = 0x4, offset = 0x4, fixed_abs, tag = 'smem constant byte address 0x4 - core index']
  #allocation1 [shape = 'u32[144,128]{1,0:T(1,128)}', space=vmem, size = 0x12000, scoped, tag = 'internal scratch']
  %s0 = inlined_call_operand.vmem [shape: f32[3,3], index: 0, kind: input, shape index: {}]
  %s1 = inlined_call_operand.vmem [shape: f32[3], index: 1, kind: input, shape index: {}]
  %s2 = inlined_call_operand.vmem [shape: f32[2,3,2,128], index: 2, kind: input, shape index: {}]
  %s3 = inlined_call_operand.vmem [shape: f32[2,3,2,128], index: 3, kind: output, shape index: {}]
  %s4 = sld [smem:[#allocation0]]
  $region53: #{model_forward.1} parent=0
    _
  %s6 = ssub.s32 1, %s4
  %s7 = scalar_select 0, %s6, %s4
  $region1: #{model_forward.1} parent=0
    #allocation2 [shape = 'u8[2048]{0}', space=smem, size = 0x800, scoped, tag = 'input window, operand 0, single buffered']
    #allocation3 [shape = 's32[2]{0}', space=sflag, size = 0x8, scoped, tag = 'scoped memory for model_forward.1']
    #allocation4 [shape = 'u8[512]{0}', space=smem, size = 0x200, scoped, tag = 'input window, operand 1, single buffered']
    #allocation5 [shape = 's32[1]{0}', space=sflag, size = 0x4, scoped, tag = 'scoped memory for model_forward.1']
    %8 = vsyncpa [#allocation3], 0
    %9 = vsyncpa [#allocation5], 0
    loop: start=0, step=1, limit=4
    $region2: #{model_forward.1} parent=1 // loop_pre_header
      _
    $region3: #{model_forward.1} parent=1 // loop_header
      %s11 = sphi 0, %s15
      %p12 = scmp.ge.s32.totalorder %s11, 4
      %s18 = sphi 0, %s30
      %s19 = sphi 0, %s26
      %s20 = sphi 0, %s18
      %s21 = sphi 0, %s19
      %s22 = sphi 0, %s20
      %s23 = sphi 0, %s21
      %s31 = sphi 0, %s31
      %s33 = sphi 0, %s31
      %s34 = sphi 0, %s33
      %s48 = sphi 0, %s34
      %s52 = sphi 0, %s52
      %s54 = sphi 0, %s52
      %s55 = sphi 0, %s54
      %s69 = sphi 0, %s55
      %s77 = sphi 0, %s79
      %s80 = sphi 0, %s77
      %s81 = sphi 0, %s80
      %s97 = sphi 0, %s81
      %s105 = sphi 0, %s107
      %s108 = sphi 0, %s105
      %s109 = sphi 0, %s108
      %s125 = sphi 0, %s109
    $region4: #{model_forward.1} parent=1 // loop_header_branch
      %14 = sbr.rel (%p12) target = $region8
    $region5: #{model_forward.1} parent=1 // loop_body
      %s16 = ssub.s32 %s11, 1
      %s17 = ssub.s32 %s11, 2
      %s24 = sadd.s32 1, %s19
      %p25 = scmp.ge.s32.totalorder %s24, 1
      %s26 = scalar_select %p25, 0, %s24
      %s27 = sadd.s32 1, %s18
      %s28 = scalar_select %p25, %s27, %s18
      %p29 = scmp.ge.s32.totalorder %s28, 2
      %s30 = scalar_select %p29, 0, %s28
      %s32 = sadd.s32 %s31, 1
      %p35 = scmp.eq.s32.totalorder %s11, 1
      %p36 = scmp.ne.s32.totalorder %s31, %s33
      %p37 = scmp.eq.s32.totalorder %s11, 0
      %p38 = por %p36, %p37
      %p39 = scmp.ne.s32.totalorder %s31, %s33
      %p40 = scmp.eq.s32.totalorder %s16, 1
      %p41 = por %p39, %p40
      %p42 = scmp.ne.s32.totalorder %s33, %s34
      %p43 = scmp.eq.s32.totalorder %s16, 0
      %p44 = por %p42, %p43
      %p45 = scmp.ne.s32.totalorder %s33, %s34
      %p46 = scmp.eq.s32.totalorder %s17, 1
      %p47 = por %p45, %p46
      %p49 = scmp.ne.s32.totalorder %s34, %s48
      %p50 = scmp.eq.s32.totalorder %s17, 0
      %p51 = por %p49, %p50
      %s53 = sadd.s32 %s52, 1
      %p56 = scmp.eq.s32.totalorder %s11, 1
      %p57 = scmp.ne.s32.totalorder %s52, %s54
      %p58 = scmp.eq.s32.totalorder %s11, 0
      %p59 = por %p57, %p58
      %p60 = scmp.ne.s32.totalorder %s52, %s54
      %p61 = scmp.eq.s32.totalorder %s16, 1
      %p62 = por %p60, %p61
      %p63 = scmp.ne.s32.totalorder %s54, %s55
      %p64 = scmp.eq.s32.totalorder %s16, 0
      %p65 = por %p63, %p64
      %p66 = scmp.ne.s32.totalorder %s54, %s55
      %p67 = scmp.eq.s32.totalorder %s17, 1
      %p68 = por %p66, %p67
      %p70 = scmp.ne.s32.totalorder %s55, %s69
      %p71 = scmp.eq.s32.totalorder %s17, 0
      %p72 = por %p70, %p71
      %s73 = ssub.s32 %s18, %s30
      %s74 = ssub.s32 %s19, %s26
      %s75 = sor.u32 %s73, %s74
      %p76 = scmp.eq.s32.totalorder %s75, 0
      %s78 = sadd.s32 %s77, 1
      %s79 = scalar_select %p76, %s77, %s78
      %p82 = pneg %p76
      %p83 = scmp.eq.s32.totalorder %s11, 1
      %p84 = por %p82, %p83
      %p85 = scmp.ne.s32.totalorder %s77, %s80
      %p86 = scmp.eq.s32.totalorder %s11, 0
      %p87 = por %p85, %p86
      %p88 = scmp.ne.s32.totalorder %s77, %s80
      %p89 = scmp.eq.s32.totalorder %s16, 1
      %p90 = por %p88, %p89
      %p91 = scmp.ne.s32.totalorder %s80, %s81
      %p92 = scmp.eq.s32.totalorder %s16, 0
      %p93 = por %p91, %p92
      %p94 = scmp.ne.s32.totalorder %s80, %s81
      %p95 = scmp.eq.s32.totalorder %s17, 1
      %p96 = por %p94, %p95
      %p98 = scmp.ne.s32.totalorder %s81, %s97
      %p99 = scmp.eq.s32.totalorder %s17, 0
      %p100 = por %p98, %p99
      %s101 = ssub.s32 %s18, %s30
      %s102 = ssub.s32 %s19, %s26
      %s103 = sor.u32 %s101, %s102
      %p104 = scmp.eq.s32.totalorder %s103, 0
      %s106 = sadd.s32 %s105, 1
      %s107 = scalar_select %p104, %s105, %s106
      %p110 = pneg %p104
      %p111 = scmp.eq.s32.totalorder %s11, 1
      %p112 = por %p110, %p111
      %p113 = scmp.ne.s32.totalorder %s105, %s108
      %p114 = scmp.eq.s32.totalorder %s11, 0
      %p115 = por %p113, %p114
      %p116 = scmp.ne.s32.totalorder %s105, %s108
      %p117 = scmp.eq.s32.totalorder %s16, 1
      %p118 = por %p116, %p117
      %p119 = scmp.ne.s32.totalorder %s108, %s109
      %p120 = scmp.eq.s32.totalorder %s16, 0
      %p121 = por %p119, %p120
      %p122 = scmp.ne.s32.totalorder %s108, %s109
      %p123 = scmp.eq.s32.totalorder %s17, 1
      %p124 = por %p122, %p123
      %p126 = scmp.ne.s32.totalorder %s109, %s125
      %p127 = scmp.eq.s32.totalorder %s17, 0
      %p128 = por %p126, %p127
      %p129 = scmp.le.s32.totalorder 1, %s11
      %p130 = scmp.lt.s32.totalorder %s11, 3
      %p131 = pnand %p129, %p130
      %p132 = pneg %p131
      // Predicated region
      $region9: #{model_forward.1} parent=5 // pred_check
        _
      $region10: #{model_forward.1} parent=5 // pred_check_branch
        %134 = sbr.rel (%p131) target = $region12
      $region11: #{model_forward.1} parent=5 // pred_region
        %s135 = ssub.s32 %s11, 1
        // Predicated region
        $region13: #{model_forward.1} parent=11 // pred_check
          %p136 = pneg %p44
        $region14: #{model_forward.1} parent=11 // pred_check_branch
          %138 = sbr.rel (%p136) target = $region16
        $region15: #{model_forward.1} parent=11 // pred_region
          %s140 = ssub.s32 64, 64
          %141 = vsyncadd [#allocation3], %s140
          %s143 = sshll.u32 %s0, 4
          %s144 = int_to_ptr.vmem [resolvable:$true] %s143
          %146 = dma.vmem_to_smem %s144, 64, [#allocation2], [#allocation3]
        $region16: #{model_forward.1} parent=11 // pred_fallthru
          _
        // Predicated region
        $region17: #{model_forward.1} parent=11 // pred_check
          %p147 = pneg %p65
        $region18: #{model_forward.1} parent=11 // pred_check_branch
          %149 = sbr.rel (%p147) target = $region20
        $region19: #{model_forward.1} parent=11 // pred_region
          %s151 = ssub.s32 16, 16
          %152 = vsyncadd [#allocation5], %s151
          %s154 = sshll.u32 %s1, 4
          %s155 = int_to_ptr.vmem [resolvable:$true] %s154
          %157 = dma.vmem_to_smem %s155, 16, [#allocation4], [#allocation5]
        $region20: #{model_forward.1} parent=11 // pred_fallthru
          _
      $region12: #{model_forward.1} parent=5 // pred_fallthru
        _
      %p158 = scmp.lt.s32.totalorder %s11, 2
      // Predicated region
      $region21: #{model_forward.1} parent=5 // pred_check
        %p159 = pneg %p158
      $region22: #{model_forward.1} parent=5 // pred_check_branch
        %161 = sbr.rel (%p159) target = $region24
      $region23: #{model_forward.1} parent=5 // pred_region
        // Predicated region
        $region25: #{model_forward.1} parent=23 // pred_check
          %p162 = pneg %p87
        $region26: #{model_forward.1} parent=23 // pred_check_branch
          %164 = sbr.rel (%p162) target = $region28
        $region27: #{model_forward.1} parent=23 // pred_region
          %p165 = scmp.lt.s32.totalorder %s18, 1
          %s166 = scalar_select %p165, %s18, 1
          %p167 = scmp.lt.s32.totalorder %s19, 0
          %s168 = scalar_select %p167, %s19, 0
          %s169 = smul.addr %s166, 3
          %s170 = sadd.s32 %s168, %s169
          %s171 = smul.addr %s170, 2
          %s172 = scalar_lea.vmem %s2, %s171
        $region28: #{model_forward.1} parent=23 // pred_fallthru
          _
      $region24: #{model_forward.1} parent=5 // pred_fallthru
        _
      %p173 = scmp.le.s32.totalorder 1, %s11
      %p174 = scmp.lt.s32.totalorder %s11, 3
      %p175 = pnand %p173, %p174
      %p176 = pneg %p175
      // Predicated region
      $region29: #{model_forward.1} parent=5 // pred_check
        _
      $region30: #{model_forward.1} parent=5 // pred_check_branch
        %178 = sbr.rel (%p175) target = $region32
      $region31: #{model_forward.1} parent=5 // pred_region
        %s179 = ssub.s32 %s11, 1
        // Predicated region
        $region33: #{model_forward.1} parent=31 // pred_check
          %p180 = pneg %p44
        $region34: #{model_forward.1} parent=31 // pred_check_branch
          %182 = sbr.rel (%p180) target = $region36
        $region35: #{model_forward.1} parent=31 // pred_region
          %183 = dma.done [#allocation3], 64
        $region36: #{model_forward.1} parent=31 // pred_fallthru
          _
        // Predicated region
        $region37: #{model_forward.1} parent=31 // pred_check
          %p184 = pneg %p65
        $region38: #{model_forward.1} parent=31 // pred_check_branch
          %186 = sbr.rel (%p184) target = $region40
        $region39: #{model_forward.1} parent=31 // pred_region
          %187 = dma.done [#allocation5], 16
        $region40: #{model_forward.1} parent=31 // pred_fallthru
          _
        %188 = sfence
        %p189 = pneg %p44
        %p190 = pneg %p41
        %p191 = pneg %p65
        %p192 = pneg %p62
        %p193 = scmp.lt.s32.totalorder %s20, 1
        %s194 = scalar_select %p193, %s20, 1
        %p195 = scmp.lt.s32.totalorder %s21, 0
        %s196 = scalar_select %p195, %s21, 0
        %s197 = smul.addr %s194, 3
        %s198 = sadd.s32 %s196, %s197
        %s199 = smul.addr %s198, 2
        %s200 = scalar_lea.vmem %s2, %s199
        %p201 = pneg %p93
        %p202 = pneg %p90
        %p203 = pneg %p121
        %p204 = pneg %p118
        %p205 = scmp.lt.s32.totalorder %s20, 1
        %s206 = scalar_select %p205, %s20, 1
        %p207 = scmp.lt.s32.totalorder %s21, 0
        %s208 = scalar_select %p207, %s21, 0
        %s209 = smul.addr %s206, 3
        %s210 = sadd.s32 %s208, %s209
        %s211 = smul.addr %s210, 2
        %s212 = scalar_lea.vmem %s3, %s211
        %p213 = scmp.lt.s32.totalorder %s20, 1
        %s214 = scalar_select %p213, %s20, 1
        %p215 = scmp.lt.s32.totalorder %s21, 0
        %s216 = scalar_select %p215, %s21, 0
        %s217 = smul.addr %s214, 3
        %s218 = sadd.s32 %s216, %s217
        %s219 = smul.addr %s218, 2
        %s220 = scalar_lea.vmem %s2, %s219
        %p221 = scmp.lt.s32.totalorder %s20, 1
        %s222 = scalar_select %p221, %s20, 1
        %p223 = scmp.lt.s32.totalorder %s21, 0
        %s224 = scalar_select %p223, %s21, 0
        %s225 = smul.addr %s222, 3
        %s226 = sadd.s32 %s224, %s225
        %s227 = smul.addr %s226, 2
        %s228 = scalar_lea.vmem %s3, %s227
        %v229 = vld [vmem:[%s220] sm:$0x3]
        %s230 = scalar_lea.vmem %s220, 2
        %v231 = vld [vmem:[%s230] sm:$0x3]
        %s232 = scalar_lea.vmem %s220, 4
        %v233 = vld [vmem:[%s232] sm:$0x3]
        %s234 = sld [smem:[#allocation2]]
        %v235 = vstv %s234
        %v236 = vmul.f32 %v229, %v235
        %s237 = sld [smem:[#allocation2 + $0x1]]
        %v238 = vstv %s237
        %v239 = vmul.f32 %v231, %v238
        %v240 = vadd.f32 %v236, %v239
        %s241 = sld [smem:[#allocation2 + $0x2]]
        %v242 = vstv %s241
        %v243 = vmul.f32 %v233, %v242
        %v244 = vadd.f32 %v240, %v243
        %s245 = sld [smem:[#allocation4]]
        %v246 = vstv %s245
        %v247 = vadd.f32 %v244, %v246
        %v248 = vadd.f32 %v247, 6.5
        %v249 = vmax.f32 %v248, 3.4
        %v250 = vmin.f32 %v249, 11.9
        %v251 = vmul.f32 %v247, %v250
        %v252 = vmul.f32 %v251, 0.06451613
        %253 = vst [vmem:[%s228] sm:$0x3] %v252
        %s254 = sld [smem:[#allocation2 + $0x80]]
        %v255 = vstv %s254
        %v256 = vmul.f32 %v229, %v255
        %s257 = sld [smem:[#allocation2 + $0x81]]
        %v258 = vstv %s257
        %v259 = vmul.f32 %v231, %v258
        %v260 = vadd.f32 %v256, %v259
        %s261 = sld [smem:[#allocation2 + $0x82]]
        %v262 = vstv %s261
        %v263 = vmul.f32 %v233, %v262
        %v264 = vadd.f32 %v260, %v263
        %s265 = sld [smem:[#allocation4 + $0x1]]
        %v266 = vstv %s265
        %v267 = vadd.f32 %v264, %v266
        %v268 = vadd.f32 %v267, 6.5
        %v269 = vmax.f32 %v268, 3.4
        %v270 = vmin.f32 %v269, 11.9
        %v271 = vmul.f32 %v267, %v270
        %v272 = vmul.f32 %v271, 0.06451613
        %s273 = scalar_lea.vmem %s228, 2
        %274 = vst [vmem:[%s273] sm:$0x3] %v272
        %s275 = sld [smem:[#allocation2 + $0x100]]
        %v276 = vstv %s275
        %v277 = vmul.f32 %v229, %v276
        %s278 = sld [smem:[#allocation2 + $0x101]]
        %v279 = vstv %s278
        %v280 = vmul.f32 %v231, %v279
        %v281 = vadd.f32 %v277, %v280
        %s282 = sld [smem:[#allocation2 + $0x102]]
        %v283 = vstv %s282
        %v284 = vmul.f32 %v233, %v283
        %v285 = vadd.f32 %v281, %v284
        %s286 = sld [smem:[#allocation4 + $0x2]]
        %v287 = vstv %s286
        %v288 = vadd.f32 %v285, %v287
        %v289 = vadd.f32 %v288, 6.5
        %v290 = vmax.f32 %v289, 3.4
        %v291 = vmin.f32 %v290, 11.9
        %v292 = vmul.f32 %v288, %v291
        %v293 = vmul.f32 %v292, 0.06451613
        %s294 = scalar_lea.vmem %s228, 4
        %295 = vst [vmem:[%s294] sm:$0x3] %v293
        %p296 = scmp.lt.s32.totalorder %s20, 1
        %s297 = scalar_select %p296, %s20, 1
        %p298 = scmp.lt.s32.totalorder %s21, 0
        %s299 = scalar_select %p298, %s21, 0
        %s300 = smul.addr %s297, 3
        %s301 = sadd.s32 %s299, %s300
        %s302 = smul.addr %s301, 2
        %s303 = scalar_lea.vmem %s3, %s302
        // Predicated region
        $region41: #{model_forward.1} parent=31 // pred_check
          %p304 = pneg %p118
        $region42: #{model_forward.1} parent=31 // pred_check_branch
          %306 = sbr.rel (%p304) target = $region44
        $region43: #{model_forward.1} parent=31 // pred_region
          _
        $region44: #{model_forward.1} parent=31 // pred_fallthru
          _
      $region32: #{model_forward.1} parent=5 // pred_fallthru
        _
      %p307 = scmp.le.s32.totalorder 2, %s11
      // Predicated region
      $region45: #{model_forward.1} parent=5 // pred_check
        %p308 = pneg %p307
      $region46: #{model_forward.1} parent=5 // pred_check_branch
        %310 = sbr.rel (%p308) target = $region48
      $region47: #{model_forward.1} parent=5 // pred_region
        %s311 = ssub.s32 %s11, 2
        // Predicated region
        $region49: #{model_forward.1} parent=47 // pred_check
          %p312 = pneg %p124
        $region50: #{model_forward.1} parent=47 // pred_check_branch
          %314 = sbr.rel (%p312) target = $region52
        $region51: #{model_forward.1} parent=47 // pred_region
          %p315 = scmp.lt.s32.totalorder %s22, 1
          %s316 = scalar_select %p315, %s22, 1
          %p317 = scmp.lt.s32.totalorder %s23, 0
          %s318 = scalar_select %p317, %s23, 0
          %s319 = smul.addr %s316, 3
          %s320 = sadd.s32 %s318, %s319
          %s321 = smul.addr %s320, 2
          %s322 = scalar_lea.vmem %s3, %s321
        $region52: #{model_forward.1} parent=47 // pred_fallthru
          _
      $region48: #{model_forward.1} parent=5 // pred_fallthru
        _
    $region6: #{model_forward.1} parent=1 // loop_footer
      %s15 = sadd.s32 1, %s11
    $region7: #{model_forward.1} parent=1 // loop_footer_branch
      %10 = sbr.rel target = $region3
    $region8: #{model_forward.1} parent=1 // loop_exit
      _
    %323 = vsyncpa [#allocation3], 1
    %s324 = scalar_lea.sflag [#allocation3], 1
    %325 = vsyncpa %s324, 1
    %326 = vsyncpa [#allocation5], 1

</llo_original>
